<compile_context>
chip_gen: v7x
topology: tpu7x:2x2x1
jax: 0.10.0
libtpu: 0.0.40
codegen_flags: <defaults>
</compile_context>

<pallas_src>
import math

import jax
import jax.numpy as jnp
from jax import lax
from jax.experimental import pallas as pl
from jax.experimental.pallas import tpu as pltpu

NEG_PAD = -1.0e4   # crf.pad_logits value for <start>/<end> (and sublane padding)
NEG_INF = -1.0e4   # "impossible" score for CRF transition constraints / start state
BP = 128           # batch lane tile (TPU lane width)


def _round_up(x, m):
    return ((x + m - 1) // m) * m


# ---------------------------------------------------------------------------
# Fused kernel: linear (bf16 MXU) + softmax + Viterbi DP + in-kernel backtrack
# ---------------------------------------------------------------------------
def _make_crf_kernel(LS, TS, S_pad, ns, start):
    def kernel(x_ref, lens_ref, w_ref, b_ref, trans_ref, endc_ref,
               p_ref, preds_ref, vit_sc, ptr_sc):
        s = pl.program_id(1)                                   # time-chunk index
        sub_iota = lax.broadcasted_iota(jnp.int32, (LS, BP), 0)

        @pl.when(s == 0)
        def _():
            # start state: 0 at <start>, NEG_INF everywhere else (incl. padding)
            vit_sc[...] = jnp.where(sub_iota == start,
                                    jnp.float32(0.0), jnp.float32(NEG_INF))

        # ---- loop-invariant values, hoisted out of the time loop ------------
        w = w_ref[...]                                         # (LS, D)  bf16
        bias = b_ref[...]                                      # (LS, 1)  f32
        trans = trans_ref[...]                                 # (LS, LS) f32
        # tcol[j][i, b] = trans[i, j] (score j -> i), lane-broadcast; 1 vreg each
        tcol = [jnp.broadcast_to(trans[:, j:j + 1], (LS, BP)) for j in range(LS)]
        end_b = jnp.broadcast_to(endc_ref[...], (LS, BP))      # trans[<end>, j]
        lens = lens_ref[...]                                   # (1, BP) int32
        t0 = s * TS

        @pl.loop(0, TS)
        def _(tl):
            t = t0 + tl
            # ---- linear layer, already in DP layout: logit[i,b] = W[i].x[b,t]+b[i]
            logit = jnp.dot(w, x_ref[tl],
                            preferred_element_type=jnp.float32) + bias   # (LS, BP)
            # ---- softmax over labels (sublanes); padded rows sit at NEG_PAD,
            #      so exp underflows to 0 and they never touch the denominator.
            m = jnp.max(logit, axis=0, keepdims=True)
            e = jnp.exp(logit - m)
            p_ref[tl] = e / jnp.sum(e, axis=0, keepdims=True)
            # ---- Viterbi step: fused single-pass max+argmax scan over source j
            vit = vit_sc[...]                                  # (LS, BP)
            best = jnp.broadcast_to(vit[0:1, :], (LS, BP)) + tcol[0]
            arg = jnp.zeros((LS, BP), jnp.int32)
            for j in range(1, LS):                             # static unroll (LS<=24)
                cand = jnp.broadcast_to(vit[j:j + 1, :], (LS, BP)) + tcol[j]
                take = cand > best
                best = jnp.where(take, cand, best)
                arg = jnp.where(take, jnp.int32(j), arg)
            remaining = lens - t                               # (1, BP)
            active = remaining > 0
            # identity backpointers at padded timesteps keep the backtrack stable
            ptr_sc[t] = jnp.where(active, arg, sub_iota)
            vit_new = jnp.where(active, best + logit, vit)
            vit_new = vit_new + jnp.where(remaining == 1, end_b, jnp.float32(0.0))
            vit_sc[...] = vit_new

        @pl.when(s == ns - 1)
        def _():
            # argmax over labels of the final Viterbi state (first max wins)
            vit = vit_sc[...]
            best = vit[0:1, :]
            idx0 = jnp.zeros((1, BP), jnp.int32)
            for j in range(1, LS):
                vj = vit[j:j + 1, :]
                take = vj > best
                best = jnp.where(take, vj, best)
                idx0 = jnp.where(take, jnp.int32(j), idx0)

            # in-kernel backtrack: preds[t] = idx; idx = ptr[t][idx, :]
            # (masked sublane reduce does the per-lane gather; backpointers
            #  never leave VMEM)
            def bstep(k, idx):
                t = S_pad - 1 - k
                preds_ref[t] = idx
                sel = sub_iota == idx                          # (LS, BP)
                nxt = jnp.sum(
                    jnp.where(sel, ptr_sc[t].astype(jnp.float32), jnp.float32(0.0)),
                    axis=0, keepdims=True)
                return nxt.astype(jnp.int32)

            lax.fori_loop(0, S_pad, bstep, idx0)

    return kernel


def crf_viterbi_fused(xT, lens2, w8, b8, trans8, end_col, *,
                      LS, TS, S_pad, B_pad, start):
    D = xT.shape[1]
    nb = B_pad // BP
    ns = S_pad // TS
    kernel = _make_crf_kernel(LS, TS, S_pad, ns, start)
    return pl.pallas_call(
        kernel,
        grid=(nb, ns),
        in_specs=[
            pl.BlockSpec((TS, D, BP), lambda ib, js: (js, 0, ib)),    # activations
            pl.BlockSpec((1, BP), lambda ib, js: (0, ib)),            # lens
            pl.BlockSpec((LS, D), lambda ib, js: (0, 0)),             # W (resident)
            pl.BlockSpec((LS, 1), lambda ib, js: (0, 0)),             # bias
            pl.BlockSpec((LS, LS), lambda ib, js: (0, 0)),            # transitions
            pl.BlockSpec((LS, 1), lambda ib, js: (0, 0)),             # trans[<end>, :]
        ],
        out_specs=[
            pl.BlockSpec((TS, LS, BP), lambda ib, js: (js, 0, ib)),   # p (transposed)
            pl.BlockSpec((S_pad, 1, BP), lambda ib, js: (0, 0, ib)),  # preds (resident)
        ],
        out_shape=[
            jax.ShapeDtypeStruct((S_pad, LS, B_pad), jnp.float32),
            jax.ShapeDtypeStruct((S_pad, 1, B_pad), jnp.int32),
        ],
        scratch_shapes=[
            pltpu.VMEM((LS, BP), jnp.float32),                 # Viterbi state (1 vreg)
            pltpu.VMEM((S_pad, LS, BP), jnp.int32),            # backpointers (VMEM only)
        ],
        compiler_params=pltpu.CompilerParams(
            dimension_semantics=("parallel", "arbitrary"),
            vmem_limit_bytes=32 * 1024 * 1024),
    )(xT, lens2, w8, b8, trans8, end_col)


# ---------------------------------------------------------------------------
# CRFDecoder.forward (labels=None path): returns (preds, p)
# ---------------------------------------------------------------------------
def crf_decoder_forward(inputs, lens, W, b, transition):
    B, S, D = inputs.shape
    L = W.shape[0]
    Lp = L + 2
    LS = _round_up(Lp, 8)                       # labels padded to a sublane multiple
    B_pad = _round_up(B, BP)                    # batch padded to the lane width
    # time-chunk size: bounds the double-buffered x block (<= ~4 MiB per buffer)
    ts_cap = max(8, min(128, (4 * 1024 * 1024) // (D * BP * 2)))
    TS = S if S <= ts_cap else ts_cap
    S_pad = _round_up(S, TS)
    start, end = L, L + 1                       # <start>/<end> label indices

    # Parameters in the labels-on-sublanes layout.  Zero weight rows + NEG_PAD
    # bias for rows >= L fuse crf.pad_logits (and the sublane padding) into the
    # matmul epilogue; padded transition rows/cols are NEG_INF so they never win.
    w8 = jnp.zeros((LS, D), jnp.bfloat16).at[:L].set(W.astype(jnp.bfloat16))
    b8 = jnp.full((LS, 1), NEG_PAD, jnp.float32).at[:L, 0].set(b.astype(jnp.float32))
    trans8 = jnp.full((LS, LS), NEG_INF, jnp.float32).at[:Lp, :Lp].set(
        transition.astype(jnp.float32))
    end_col = trans8[end].reshape(LS, 1)        # trans[<end>, j] = score(j -> <end>)

    # Activations: (B,S,D) -> bf16 (S_pad, D, B_pad) so time is the block-major
    # axis (dynamic in-kernel indexing) and batch is lane-dense.
    xT = jnp.transpose(inputs.astype(jnp.bfloat16), (1, 2, 0))
    xT = jnp.zeros((S_pad, D, B_pad), jnp.bfloat16).at[:S, :, :B].set(xT)
    lens2 = jnp.zeros((1, B_pad), jnp.int32).at[0, :B].set(lens.astype(jnp.int32))

    pT, preds_pad = crf_viterbi_fused(xT, lens2, w8, b8, trans8, end_col,
                                      LS=LS, TS=TS, S_pad=S_pad, B_pad=B_pad,
                                      start=start)

    # Small host-side relayouts (32 B/token for p, 4 B/token for preds).
    p = jnp.transpose(pT[:S, :L, :B], (2, 0, 1))                  # (B, S, L) f32
    preds = jnp.transpose(preds_pad[:S, 0, :B], (1, 0))           # (B, S) int32
    return preds, p


if __name__ == "__main__":
    B, S, D, L = 2, 8, 32, 5   # batch, seq, hidden, label_size
    Lp = L + 2

    key = jax.random.PRNGKey(0)
    k1, k2, k3, k4 = jax.random.split(key, 4)

    inputs = jax.random.normal(k1, (B, S, D), jnp.float32)
    lens = jnp.array([8, 5], jnp.int32)

    # nn.Linear(D, L): init_weights -> uniform(-sqrt(6/(L+D)), sqrt(6/(L+D))) on W
    bound = math.sqrt(6.0 / (L + D))
    W = jax.random.uniform(k2, (L, D), jnp.float32, -bound, bound)
    bb = 1.0 / math.sqrt(D)
    b = jax.random.uniform(k3, (L,), jnp.float32, -bb, bb)

    # CRF(L+2) transition matrix: T[i, j] = score of transitioning j -> i
    trans = 0.1 * jax.random.normal(k4, (Lp, Lp), jnp.float32)
    trans = trans.at[:, Lp - 1].set(NEG_INF)   # cannot transition *from* <end>
    trans = trans.at[Lp - 2, :].set(NEG_INF)   # cannot transition *to* <start>

    preds, p = jax.jit(crf_decoder_forward)(inputs, lens, W, b, trans)
    jax.block_until_ready((preds, p))

    assert preds.shape == (B, S) and p.shape == (B, S, L)
    assert preds.dtype == jnp.int32
    assert bool(jnp.all((preds >= 0) & (preds < L)))          # Viterbi picks real labels
    assert bool(jnp.allclose(p.sum(-1), 1.0, atol=1e-3))      # softmax rows normalize
    print("KERNEL_OK")
</pallas_src>

<mosaic_0001>
module attributes {stable_mosaic.version = 11 : i64} {
  func.func @kernel(%arg0: i32, %arg1: i32, %arg2: memref<8x32x128xbf16, #tpu.memory_space<vmem>>, %arg3: memref<1x128xi32, #tpu.memory_space<vmem>>, %arg4: memref<8x32xbf16, #tpu.memory_space<vmem>>, %arg5: memref<8x1xf32, #tpu.memory_space<vmem>>, %arg6: memref<8x8xf32, #tpu.memory_space<vmem>>, %arg7: memref<8x1xf32, #tpu.memory_space<vmem>>, %arg8: memref<8x8x128xf32, #tpu.memory_space<vmem>>, %arg9: memref<8x1x128xi32, #tpu.memory_space<vmem>>, %arg10: memref<8x128xf32, #tpu.memory_space<vmem>>, %arg11: memref<8x8x128xi32, #tpu.memory_space<vmem>>) attributes {dimension_semantics = [#tpu.dimension_semantics<parallel>, #tpu.dimension_semantics<arbitrary>], iteration_bounds = array<i64: 1, 1>, scalar_prefetch = 0 : i64, scratch_operands = 2 : i64, tpu.core_type = #tpu.core_type<tc>, window_params = [{transform_indices = @transform_0, window_bounds = array<i64: 8, 32, 128>}, {transform_indices = @transform_1, window_bounds = array<i64: 1, 128>}, {pipeline_mode = #tpu.pipeline_mode<synchronous>, transform_indices = @transform_2, window_bounds = array<i64: 8, 32>}, {pipeline_mode = #tpu.pipeline_mode<synchronous>, transform_indices = @transform_3, window_bounds = array<i64: 8, 1>}, {pipeline_mode = #tpu.pipeline_mode<synchronous>, transform_indices = @transform_4, window_bounds = array<i64: 8, 8>}, {pipeline_mode = #tpu.pipeline_mode<synchronous>, transform_indices = @transform_5, window_bounds = array<i64: 8, 1>}, {transform_indices = @transform_6, window_bounds = array<i64: 8, 8, 128>}, {transform_indices = @transform_7, window_bounds = array<i64: 8, 1, 128>}]} {
    %0 = tpu.iota {dimensions = array<i32: 0>} : vector<8x128xi32>
    %c0_i32 = arith.constant 0 : i32
    %1 = arith.cmpi eq, %arg1, %c0_i32 : i32
    %2 = arith.extui %1 : i1 to i32
    %c0_i32_0 = arith.constant 0 : i32
    %3 = arith.cmpi ne, %2, %c0_i32_0 : i32
    scf.if %3 {
      %c5_i32 = arith.constant 5 : i32
      %40 = vector.broadcast %c5_i32 : i32 to vector<8x128xi32>
      %41 = arith.cmpi eq, %0, %40 : vector<8x128xi32>
      %cst = arith.constant 0.000000e+00 : f32
      %cst_15 = arith.constant -1.000000e+04 : f32
      %42 = vector.broadcast %cst : f32 to vector<8x128xf32>
      %43 = vector.broadcast %cst_15 : f32 to vector<8x128xf32>
      %44 = arith.select %41, %42, %43 : vector<8x128xi1>, vector<8x128xf32>
      %c0_16 = arith.constant 0 : index
      %c0_17 = arith.constant 0 : index
      %45 = vector.load %arg10[%c0_16, %c0_17] : memref<8x128xf32, #tpu.memory_space<vmem>>, vector<8x128xf32>
      tpu.vector_store %arg10[%c0_16, %c0_17], %44 {strides = array<i32>} : memref<8x128xf32, #tpu.memory_space<vmem>>, vector<8x128xf32>,
    } else {
    }
    %c0 = arith.constant 0 : index
    %c0_1 = arith.constant 0 : index
    %4 = vector.load %arg4[%c0, %c0_1] : memref<8x32xbf16, #tpu.memory_space<vmem>>, vector<8x32xbf16>
    %c0_2 = arith.constant 0 : index
    %c0_3 = arith.constant 0 : index
    %5 = vector.load %arg5[%c0_2, %c0_3] : memref<8x1xf32, #tpu.memory_space<vmem>>, vector<8x1xf32>
    %c0_4 = arith.constant 0 : index
    %c0_5 = arith.constant 0 : index
    %6 = vector.load %arg6[%c0_4, %c0_5] : memref<8x8xf32, #tpu.memory_space<vmem>>, vector<8x8xf32>
    %7 = vector.extract_strided_slice %6 {offsets = [0, 0], sizes = [8, 1], strides = [1, 1]} : vector<8x8xf32> to vector<8x1xf32>
    %8 = vector.shape_cast %7 : vector<8x1xf32> to vector<8x1xf32>
    %9 = vector.broadcast %8 : vector<8x1xf32> to vector<8x128xf32>
    %10 = vector.extract_strided_slice %6 {offsets = [0, 1], sizes = [8, 1], strides = [1, 1]} : vector<8x8xf32> to vector<8x1xf32>
    %11 = vector.shape_cast %10 : vector<8x1xf32> to vector<8x1xf32>
    %12 = vector.broadcast %11 : vector<8x1xf32> to vector<8x128xf32>
    %13 = vector.extract_strided_slice %6 {offsets = [0, 2], sizes = [8, 1], strides = [1, 1]} : vector<8x8xf32> to vector<8x1xf32>
    %14 = vector.shape_cast %13 : vector<8x1xf32> to vector<8x1xf32>
    %15 = vector.broadcast %14 : vector<8x1xf32> to vector<8x128xf32>
    %16 = vector.extract_strided_slice %6 {offsets = [0, 3], sizes = [8, 1], strides = [1, 1]} : vector<8x8xf32> to vector<8x1xf32>
    %17 = vector.shape_cast %16 : vector<8x1xf32> to vector<8x1xf32>
    %18 = vector.broadcast %17 : vector<8x1xf32> to vector<8x128xf32>
    %19 = vector.extract_strided_slice %6 {offsets = [0, 4], sizes = [8, 1], strides = [1, 1]} : vector<8x8xf32> to vector<8x1xf32>
    %20 = vector.shape_cast %19 : vector<8x1xf32> to vector<8x1xf32>
    %21 = vector.broadcast %20 : vector<8x1xf32> to vector<8x128xf32>
    %22 = vector.extract_strided_slice %6 {offsets = [0, 5], sizes = [8, 1], strides = [1, 1]} : vector<8x8xf32> to vector<8x1xf32>
    %23 = vector.shape_cast %22 : vector<8x1xf32> to vector<8x1xf32>
    %24 = vector.broadcast %23 : vector<8x1xf32> to vector<8x128xf32>
    %25 = vector.extract_strided_slice %6 {offsets = [0, 6], sizes = [8, 1], strides = [1, 1]} : vector<8x8xf32> to vector<8x1xf32>
    %26 = vector.shape_cast %25 : vector<8x1xf32> to vector<8x1xf32>
    %27 = vector.broadcast %26 : vector<8x1xf32> to vector<8x128xf32>
    %28 = vector.extract_strided_slice %6 {offsets = [0, 7], sizes = [8, 1], strides = [1, 1]} : vector<8x8xf32> to vector<8x1xf32>
    %29 = vector.shape_cast %28 : vector<8x1xf32> to vector<8x1xf32>
    %30 = vector.broadcast %29 : vector<8x1xf32> to vector<8x128xf32>
    %c0_6 = arith.constant 0 : index
    %c0_7 = arith.constant 0 : index
    %31 = vector.load %arg7[%c0_6, %c0_7] : memref<8x1xf32, #tpu.memory_space<vmem>>, vector<8x1xf32>
    %32 = vector.shape_cast %31 : vector<8x1xf32> to vector<8x1xf32>
    %33 = vector.broadcast %32 : vector<8x1xf32> to vector<8x128xf32>
    %c0_8 = arith.constant 0 : index
    %c0_9 = arith.constant 0 : index
    %34 = vector.load %arg3[%c0_8, %c0_9] : memref<1x128xi32, #tpu.memory_space<vmem>>, vector<1x128xi32>
    %c8_i32 = arith.constant 8 : i32
    %35 = arith.muli %arg1, %c8_i32 : i32
    %c0_i32_10 = arith.constant 0 : i32
    %c8_i32_11 = arith.constant 8 : i32
    %36 = arith.addi %c0_i32_10, %c8_i32_11 : i32
    %c1_i32 = arith.constant 1 : i32
    scf.for %arg12 = %c0_i32_10 to %36 step %c1_i32  : i32 {
      %c1_i32_15 = arith.constant 1 : i32
      %40 = arith.muli %arg12, %c1_i32_15 : i32
      %c0_i32_16 = arith.constant 0 : i32
      %41 = arith.addi %c0_i32_16, %40 : i32
      %42 = arith.addi %35, %41 : i32
      %43 = arith.index_cast %41 : i32 to index
      %c0_17 = arith.constant 0 : index
      %c0_18 = arith.constant 0 : index
      %44 = vector.load %arg2[%43, %c0_17, %c0_18] : memref<8x32x128xbf16, #tpu.memory_space<vmem>>, vector<1x32x128xbf16>
      %45 = vector.shape_cast %44 : vector<1x32x128xbf16> to vector<32x128xbf16>
      %cst = arith.constant dense<0.000000e+00> : vector<8x128xf32>
      %46 = tpu.matmul %4, %45, %cst {dimension_numbers = #tpu.dot_dimension_numbers<[1], [0], [0], [1], [0, 0, 1, 1], [], []>} : vector<8x32xbf16>, vector<32x128xbf16>, vector<8x128xf32> -> vector<8x128xf32>
      %47 = vector.broadcast %5 : vector<8x1xf32> to vector<8x128xf32>
      %48 = arith.addf %46, %47 : vector<8x128xf32>
      %cst_19 = arith.constant dense<0xFF800000> : vector<128xf32>
      %49 = vector.multi_reduction <maximumf>, %48, %cst_19 [0] : vector<8x128xf32> to vector<128xf32>
      %50 = vector.shape_cast %49 : vector<128xf32> to vector<1x128xf32>
      %51 = vector.broadcast %50 : vector<1x128xf32> to vector<8x128xf32>
      %52 = arith.subf %48, %51 : vector<8x128xf32>
      %53 = math.exp %52 : vector<8x128xf32>
      %cst_20 = arith.constant dense<0.000000e+00> : vector<128xf32>
      %54 = vector.multi_reduction <add>, %53, %cst_20 [0] : vector<8x128xf32> to vector<128xf32>
      %55 = vector.shape_cast %54 : vector<128xf32> to vector<1x128xf32>
      %56 = vector.broadcast %55 : vector<1x128xf32> to vector<8x128xf32>
      %57 = arith.divf %53, %56 : vector<8x128xf32>
      %58 = arith.index_cast %41 : i32 to index
      %c0_21 = arith.constant 0 : index
      %c0_22 = arith.constant 0 : index
      %59 = vector.load %arg8[%58, %c0_21, %c0_22] : memref<8x8x128xf32, #tpu.memory_space<vmem>>, vector<1x8x128xf32>
      %60 = vector.shape_cast %59 : vector<1x8x128xf32> to vector<8x128xf32>
      %61 = vector.shape_cast %57 : vector<8x128xf32> to vector<1x8x128xf32>
      tpu.vector_store %arg8[%58, %c0_21, %c0_22], %61 {strides = array<i32>} : memref<8x8x128xf32, #tpu.memory_space<vmem>>, vector<1x8x128xf32>,
      %c0_23 = arith.constant 0 : index
      %c0_24 = arith.constant 0 : index
      %62 = vector.load %arg10[%c0_23, %c0_24] : memref<8x128xf32, #tpu.memory_space<vmem>>, vector<8x128xf32>
      %63 = vector.extract_strided_slice %62 {offsets = [0, 0], sizes = [1, 128], strides = [1, 1]} : vector<8x128xf32> to vector<1x128xf32>
      %64 = vector.shape_cast %63 : vector<1x128xf32> to vector<1x128xf32>
      %65 = vector.broadcast %64 : vector<1x128xf32> to vector<8x128xf32>
      %66 = arith.addf %65, %9 : vector<8x128xf32>
      %c0_i32_25 = arith.constant 0 : i32
      %67 = vector.broadcast %c0_i32_25 : i32 to vector<8x128xi32>
      %68 = vector.extract_strided_slice %62 {offsets = [1, 0], sizes = [1, 128], strides = [1, 1]} : vector<8x128xf32> to vector<1x128xf32>
      %69 = vector.shape_cast %68 : vector<1x128xf32> to vector<1x128xf32>
      %70 = vector.broadcast %69 : vector<1x128xf32> to vector<8x128xf32>
      %71 = arith.addf %70, %12 : vector<8x128xf32>
      %72 = arith.cmpf ogt, %71, %66 : vector<8x128xf32>
      %73 = arith.select %72, %71, %66 : vector<8x128xi1>, vector<8x128xf32>
      %c1_i32_26 = arith.constant 1 : i32
      %74 = vector.broadcast %c1_i32_26 : i32 to vector<8x128xi32>
      %75 = arith.select %72, %74, %67 : vector<8x128xi1>, vector<8x128xi32>
      %76 = vector.extract_strided_slice %62 {offsets = [2, 0], sizes = [1, 128], strides = [1, 1]} : vector<8x128xf32> to vector<1x128xf32>
      %77 = vector.shape_cast %76 : vector<1x128xf32> to vector<1x128xf32>
      %78 = vector.broadcast %77 : vector<1x128xf32> to vector<8x128xf32>
      %79 = arith.addf %78, %15 : vector<8x128xf32>
      %80 = arith.cmpf ogt, %79, %73 : vector<8x128xf32>
      %81 = arith.select %80, %79, %73 : vector<8x128xi1>, vector<8x128xf32>
      %c2_i32 = arith.constant 2 : i32
      %82 = vector.broadcast %c2_i32 : i32 to vector<8x128xi32>
      %83 = arith.select %80, %82, %75 : vector<8x128xi1>, vector<8x128xi32>
      %84 = vector.extract_strided_slice %62 {offsets = [3, 0], sizes = [1, 128], strides = [1, 1]} : vector<8x128xf32> to vector<1x128xf32>
      %85 = vector.shape_cast %84 : vector<1x128xf32> to vector<1x128xf32>
      %86 = vector.broadcast %85 : vector<1x128xf32> to vector<8x128xf32>
      %87 = arith.addf %86, %18 : vector<8x128xf32>
      %88 = arith.cmpf ogt, %87, %81 : vector<8x128xf32>
      %89 = arith.select %88, %87, %81 : vector<8x128xi1>, vector<8x128xf32>
      %c3_i32 = arith.constant 3 : i32
      %90 = vector.broadcast %c3_i32 : i32 to vector<8x128xi32>
      %91 = arith.select %88, %90, %83 : vector<8x128xi1>, vector<8x128xi32>
      %92 = vector.extract_strided_slice %62 {offsets = [4, 0], sizes = [1, 128], strides = [1, 1]} : vector<8x128xf32> to vector<1x128xf32>
      %93 = vector.shape_cast %92 : vector<1x128xf32> to vector<1x128xf32>
      %94 = vector.broadcast %93 : vector<1x128xf32> to vector<8x128xf32>
      %95 = arith.addf %94, %21 : vector<8x128xf32>
      %96 = arith.cmpf ogt, %95, %89 : vector<8x128xf32>
      %97 = arith.select %96, %95, %89 : vector<8x128xi1>, vector<8x128xf32>
      %c4_i32 = arith.constant 4 : i32
      %98 = vector.broadcast %c4_i32 : i32 to vector<8x128xi32>
      %99 = arith.select %96, %98, %91 : vector<8x128xi1>, vector<8x128xi32>
      %100 = vector.extract_strided_slice %62 {offsets = [5, 0], sizes = [1, 128], strides = [1, 1]} : vector<8x128xf32> to vector<1x128xf32>
      %101 = vector.shape_cast %100 : vector<1x128xf32> to vector<1x128xf32>
      %102 = vector.broadcast %101 : vector<1x128xf32> to vector<8x128xf32>
      %103 = arith.addf %102, %24 : vector<8x128xf32>
      %104 = arith.cmpf ogt, %103, %97 : vector<8x128xf32>
      %105 = arith.select %104, %103, %97 : vector<8x128xi1>, vector<8x128xf32>
      %c5_i32 = arith.constant 5 : i32
      %106 = vector.broadcast %c5_i32 : i32 to vector<8x128xi32>
      %107 = arith.select %104, %106, %99 : vector<8x128xi1>, vector<8x128xi32>
      %108 = vector.extract_strided_slice %62 {offsets = [6, 0], sizes = [1, 128], strides = [1, 1]} : vector<8x128xf32> to vector<1x128xf32>
      %109 = vector.shape_cast %108 : vector<1x128xf32> to vector<1x128xf32>
      %110 = vector.broadcast %109 : vector<1x128xf32> to vector<8x128xf32>
      %111 = arith.addf %110, %27 : vector<8x128xf32>
      %112 = arith.cmpf ogt, %111, %105 : vector<8x128xf32>
      %113 = arith.select %112, %111, %105 : vector<8x128xi1>, vector<8x128xf32>
      %c6_i32 = arith.constant 6 : i32
      %114 = vector.broadcast %c6_i32 : i32 to vector<8x128xi32>
      %115 = arith.select %112, %114, %107 : vector<8x128xi1>, vector<8x128xi32>
      %116 = vector.extract_strided_slice %62 {offsets = [7, 0], sizes = [1, 128], strides = [1, 1]} : vector<8x128xf32> to vector<1x128xf32>
      %117 = vector.shape_cast %116 : vector<1x128xf32> to vector<1x128xf32>
      %118 = vector.broadcast %117 : vector<1x128xf32> to vector<8x128xf32>
      %119 = arith.addf %118, %30 : vector<8x128xf32>
      %120 = arith.cmpf ogt, %119, %113 : vector<8x128xf32>
      %121 = arith.select %120, %119, %113 : vector<8x128xi1>, vector<8x128xf32>
      %c7_i32 = arith.constant 7 : i32
      %122 = vector.broadcast %c7_i32 : i32 to vector<8x128xi32>
      %123 = arith.select %120, %122, %115 : vector<8x128xi1>, vector<8x128xi32>
      %124 = vector.broadcast %42 : i32 to vector<1x128xi32>
      %125 = arith.subi %34, %124 : vector<1x128xi32>
      %c0_i32_27 = arith.constant 0 : i32
      %126 = vector.broadcast %c0_i32_27 : i32 to vector<1x128xi32>
      %127 = arith.cmpi sgt, %125, %126 : vector<1x128xi32>
      %128 = vector.shape_cast %127 : vector<1x128xi1> to vector<1x128xi1>
      %129 = vector.broadcast %128 : vector<1x128xi1> to vector<8x128xi1>
      %130 = arith.select %129, %123, %0 : vector<8x128xi1>, vector<8x128xi32>
      %131 = arith.index_cast %42 : i32 to index
      %c0_28 = arith.constant 0 : index
      %c0_29 = arith.constant 0 : index
      %132 = vector.load %arg11[%131, %c0_28, %c0_29] : memref<8x8x128xi32, #tpu.memory_space<vmem>>, vector<1x8x128xi32>
      %133 = vector.shape_cast %132 : vector<1x8x128xi32> to vector<8x128xi32>
      %134 = vector.shape_cast %130 : vector<8x128xi32> to vector<1x8x128xi32>
      tpu.vector_store %arg11[%131, %c0_28, %c0_29], %134 {strides = array<i32>} : memref<8x8x128xi32, #tpu.memory_space<vmem>>, vector<1x8x128xi32>,
      %135 = arith.addf %121, %48 : vector<8x128xf32>
      %136 = vector.shape_cast %127 : vector<1x128xi1> to vector<1x128xi1>
      %137 = vector.broadcast %136 : vector<1x128xi1> to vector<8x128xi1>
      %138 = arith.select %137, %135, %62 : vector<8x128xi1>, vector<8x128xf32>
      %c1_i32_30 = arith.constant 1 : i32
      %139 = vector.broadcast %c1_i32_30 : i32 to vector<1x128xi32>
      %140 = arith.cmpi eq, %125, %139 : vector<1x128xi32>
      %cst_31 = arith.constant 0.000000e+00 : f32
      %141 = vector.shape_cast %140 : vector<1x128xi1> to vector<1x128xi1>
      %142 = vector.broadcast %141 : vector<1x128xi1> to vector<8x128xi1>
      %143 = vector.broadcast %cst_31 : f32 to vector<8x128xf32>
      %144 = arith.select %142, %33, %143 : vector<8x128xi1>, vector<8x128xf32>
      %145 = arith.addf %138, %144 : vector<8x128xf32>
      %c0_32 = arith.constant 0 : index
      %c0_33 = arith.constant 0 : index
      %146 = vector.load %arg10[%c0_32, %c0_33] : memref<8x128xf32, #tpu.memory_space<vmem>>, vector<8x128xf32>
      tpu.vector_store %arg10[%c0_32, %c0_33], %145 {strides = array<i32>} : memref<8x128xf32, #tpu.memory_space<vmem>>, vector<8x128xf32>,
    }
    %c8_i32_12 = arith.constant 8 : i32
    %c0_i32_13 = arith.constant 0 : i32
    %37 = arith.cmpi eq, %arg1, %c0_i32_13 : i32
    %38 = arith.extui %37 : i1 to i32
    %c0_i32_14 = arith.constant 0 : i32
    %39 = arith.cmpi ne, %38, %c0_i32_14 : i32
    scf.if %39 {
      %c0_15 = arith.constant 0 : index
      %c0_16 = arith.constant 0 : index
      %40 = vector.load %arg10[%c0_15, %c0_16] : memref<8x128xf32, #tpu.memory_space<vmem>>, vector<8x128xf32>
      %41 = vector.extract_strided_slice %40 {offsets = [0, 0], sizes = [1, 128], strides = [1, 1]} : vector<8x128xf32> to vector<1x128xf32>
      %c0_i32_17 = arith.constant 0 : i32
      %42 = vector.broadcast %c0_i32_17 : i32 to vector<1x128xi32>
      %43 = vector.extract_strided_slice %40 {offsets = [1, 0], sizes = [1, 128], strides = [1, 1]} : vector<8x128xf32> to vector<1x128xf32>
      %44 = arith.cmpf ogt, %43, %41 : vector<1x128xf32>
      %45 = arith.select %44, %43, %41 : vector<1x128xi1>, vector<1x128xf32>
      %c1_i32_18 = arith.constant 1 : i32
      %46 = vector.broadcast %c1_i32_18 : i32 to vector<1x128xi32>
      %47 = arith.select %44, %46, %42 : vector<1x128xi1>, vector<1x128xi32>
      %48 = vector.extract_strided_slice %40 {offsets = [2, 0], sizes = [1, 128], strides = [1, 1]} : vector<8x128xf32> to vector<1x128xf32>
      %49 = arith.cmpf ogt, %48, %45 : vector<1x128xf32>
      %50 = arith.select %49, %48, %45 : vector<1x128xi1>, vector<1x128xf32>
      %c2_i32 = arith.constant 2 : i32
      %51 = vector.broadcast %c2_i32 : i32 to vector<1x128xi32>
      %52 = arith.select %49, %51, %47 : vector<1x128xi1>, vector<1x128xi32>
      %53 = vector.extract_strided_slice %40 {offsets = [3, 0], sizes = [1, 128], strides = [1, 1]} : vector<8x128xf32> to vector<1x128xf32>
      %54 = arith.cmpf ogt, %53, %50 : vector<1x128xf32>
      %55 = arith.select %54, %53, %50 : vector<1x128xi1>, vector<1x128xf32>
      %c3_i32 = arith.constant 3 : i32
      %56 = vector.broadcast %c3_i32 : i32 to vector<1x128xi32>
      %57 = arith.select %54, %56, %52 : vector<1x128xi1>, vector<1x128xi32>
      %58 = vector.extract_strided_slice %40 {offsets = [4, 0], sizes = [1, 128], strides = [1, 1]} : vector<8x128xf32> to vector<1x128xf32>
      %59 = arith.cmpf ogt, %58, %55 : vector<1x128xf32>
      %60 = arith.select %59, %58, %55 : vector<1x128xi1>, vector<1x128xf32>
      %c4_i32 = arith.constant 4 : i32
      %61 = vector.broadcast %c4_i32 : i32 to vector<1x128xi32>
      %62 = arith.select %59, %61, %57 : vector<1x128xi1>, vector<1x128xi32>
      %63 = vector.extract_strided_slice %40 {offsets = [5, 0], sizes = [1, 128], strides = [1, 1]} : vector<8x128xf32> to vector<1x128xf32>
      %64 = arith.cmpf ogt, %63, %60 : vector<1x128xf32>
      %65 = arith.select %64, %63, %60 : vector<1x128xi1>, vector<1x128xf32>
      %c5_i32 = arith.constant 5 : i32
      %66 = vector.broadcast %c5_i32 : i32 to vector<1x128xi32>
      %67 = arith.select %64, %66, %62 : vector<1x128xi1>, vector<1x128xi32>
      %68 = vector.extract_strided_slice %40 {offsets = [6, 0], sizes = [1, 128], strides = [1, 1]} : vector<8x128xf32> to vector<1x128xf32>
      %69 = arith.cmpf ogt, %68, %65 : vector<1x128xf32>
      %70 = arith.select %69, %68, %65 : vector<1x128xi1>, vector<1x128xf32>
      %c6_i32 = arith.constant 6 : i32
      %71 = vector.broadcast %c6_i32 : i32 to vector<1x128xi32>
      %72 = arith.select %69, %71, %67 : vector<1x128xi1>, vector<1x128xi32>
      %73 = vector.extract_strided_slice %40 {offsets = [7, 0], sizes = [1, 128], strides = [1, 1]} : vector<8x128xf32> to vector<1x128xf32>
      %74 = arith.cmpf ogt, %73, %70 : vector<1x128xf32>
      %c7_i32 = arith.constant 7 : i32
      %75 = vector.broadcast %c7_i32 : i32 to vector<1x128xi32>
      %76 = arith.select %74, %75, %72 : vector<1x128xi1>, vector<1x128xi32>
      %c0_i32_19 = arith.constant 0 : i32
      %c8_i32_20 = arith.constant 8 : i32
      %77 = arith.addi %c0_i32_19, %c8_i32_20 : i32
      %c1_i32_21 = arith.constant 1 : i32
      %78 = scf.for %arg12 = %c0_i32_19 to %77 step %c1_i32_21 iter_args(%arg13 = %76) -> (vector<1x128xi32>)  : i32 {
        %c7_i32_23 = arith.constant 7 : i32
        %79 = arith.subi %c7_i32_23, %arg12 : i32
        %80 = arith.index_cast %79 : i32 to index
        %c0_24 = arith.constant 0 : index
        %c0_25 = arith.constant 0 : index
        %81 = vector.load %arg9[%80, %c0_24, %c0_25] : memref<8x1x128xi32, #tpu.memory_space<vmem>>, vector<1x1x128xi32>
        %82 = vector.shape_cast %81 : vector<1x1x128xi32> to vector<1x128xi32>
        %83 = vector.shape_cast %arg13 : vector<1x128xi32> to vector<1x1x128xi32>
        tpu.vector_store %arg9[%80, %c0_24, %c0_25], %83 {strides = array<i32>} : memref<8x1x128xi32, #tpu.memory_space<vmem>>, vector<1x1x128xi32>,
        %84 = vector.broadcast %arg13 : vector<1x128xi32> to vector<8x128xi32>
        %85 = arith.cmpi eq, %0, %84 : vector<8x128xi32>
        %86 = arith.index_cast %79 : i32 to index
        %c0_26 = arith.constant 0 : index
        %c0_27 = arith.constant 0 : index
        %87 = vector.load %arg11[%86, %c0_26, %c0_27] : memref<8x8x128xi32, #tpu.memory_space<vmem>>, vector<1x8x128xi32>
        %88 = vector.shape_cast %87 : vector<1x8x128xi32> to vector<8x128xi32>
        %89 = arith.sitofp %88 : vector<8x128xi32> to vector<8x128xf32>
        %cst = arith.constant 0.000000e+00 : f32
        %90 = vector.broadcast %cst : f32 to vector<8x128xf32>
        %91 = arith.select %85, %89, %90 : vector<8x128xi1>, vector<8x128xf32>
        %cst_28 = arith.constant dense<0.000000e+00> : vector<128xf32>
        %92 = vector.multi_reduction <add>, %91, %cst_28 [0] : vector<8x128xf32> to vector<128xf32>
        %93 = vector.shape_cast %92 : vector<128xf32> to vector<1x128xf32>
        %94 = arith.fptosi %93 : vector<1x128xf32> to vector<1x128xi32>
        scf.yield %94 : vector<1x128xi32>
      }
      %c8_i32_22 = arith.constant 8 : i32
    } else {
    }
    return
  }
  func.func @transform_0(%arg0: i32, %arg1: i32) -> (i32, i32, i32) {
    %c0_i32 = arith.constant 0 : i32
    %c0_i32_0 = arith.constant 0 : i32
    return %arg1, %c0_i32, %arg0 : i32, i32, i32
  }
  func.func @transform_1(%arg0: i32, %arg1: i32) -> (i32, i32) {
    %c0_i32 = arith.constant 0 : i32
    %c0_i32_0 = arith.constant 0 : i32
    return %c0_i32, %arg0 : i32, i32
  }
  func.func @transform_2(%arg0: i32, %arg1: i32) -> (i32, i32) {
    %c0_i32 = arith.constant 0 : i32
    %c0_i32_0 = arith.constant 0 : i32
    %c0_i32_1 = arith.constant 0 : i32
    return %c0_i32, %c0_i32_0 : i32, i32
  }
  func.func @transform_3(%arg0: i32, %arg1: i32) -> (i32, i32) {
    %c0_i32 = arith.constant 0 : i32
    %c0_i32_0 = arith.constant 0 : i32
    %c0_i32_1 = arith.constant 0 : i32
    return %c0_i32, %c0_i32_0 : i32, i32
  }
  func.func @transform_4(%arg0: i32, %arg1: i32) -> (i32, i32) {
    %c0_i32 = arith.constant 0 : i32
    %c0_i32_0 = arith.constant 0 : i32
    %c0_i32_1 = arith.constant 0 : i32
    return %c0_i32, %c0_i32_0 : i32, i32
  }
  func.func @transform_5(%arg0: i32, %arg1: i32) -> (i32, i32) {
    %c0_i32 = arith.constant 0 : i32
    %c0_i32_0 = arith.constant 0 : i32
    %c0_i32_1 = arith.constant 0 : i32
    return %c0_i32, %c0_i32_0 : i32, i32
  }
  func.func @transform_6(%arg0: i32, %arg1: i32) -> (i32, i32, i32) {
    %c0_i32 = arith.constant 0 : i32
    %c0_i32_0 = arith.constant 0 : i32
    return %arg1, %c0_i32, %arg0 : i32, i32, i32
  }
  func.func @transform_7(%arg0: i32, %arg1: i32) -> (i32, i32, i32) {
    %c0_i32 = arith.constant 0 : i32
    %c0_i32_0 = arith.constant 0 : i32
    %c0_i32_1 = arith.constant 0 : i32
    return %c0_i32, %c0_i32_0, %arg0 : i32, i32, i32
  }
}

</mosaic_0001>

<llo_original>
// kernel: crf_decoder_forward.1
$region0: #{crf_decoder_forward.1}
  #allocation0 [shape = 'u32[]', space=smem, size = 0x4, offset = 0x4, fixed_abs, tag = 'smem constant byte address 0x4 - core index']
  #allocation1 [shape = 'u32[144,128]{1,0:T(1,128)}', space=vmem, size = 0x12000, scoped, tag = 'internal scratch']
  #allocation2 [shape = 'f32[8,128]{1,0:T(8,128)}', space=vmem, size = 0x1000, scoped, tag = 'scratch operand']
  #allocation3 [shape = 's32[8,8,128]{2,1,0:T(8,128)}', space=vmem, size = 0x8000, scoped, tag = 'scratch operand']
  %s0 = inlined_call_operand.vmem [shape: bf16[8,32,128], index: 0, kind: input, shape index: {}]
  %s1 = inlined_call_operand.vmem [shape: s32[1,128], index: 1, kind: input, shape index: {}]
  %s2 = inlined_call_operand.vmem [shape: bf16[8,32], index: 2, kind: input, shape index: {}]
  %s3 = inlined_call_operand.vmem [shape: f32[8,1], index: 3, kind: input, shape index: {}]
  %s4 = inlined_call_operand.vmem [shape: f32[8,8], index: 4, kind: input, shape index: {}]
  %s5 = inlined_call_operand.vmem [shape: f32[8,1], index: 5, kind: input, shape index: {}]
  %s6 = inlined_call_operand.vmem [shape: f32[8,8,128], index: 6, kind: output, shape index: {0}]
  %s7 = inlined_call_operand.vmem [shape: s32[8,1,128], index: 7, kind: output, shape index: {1}]
  %8 = xla_tuple %s6, %s7
  %s9 = sld [smem:[#allocation0]]
  $region64: #{crf_decoder_forward.1} parent=0
    _
  %s11 = ssub.s32 1, %s9
  %s12 = scalar_select 0, %s11, %s9
  // Predicated region
  $region2: #{crf_decoder_forward.1} parent=0 // pred_check
    _
  $region3: #{crf_decoder_forward.1} parent=0 // pred_check_branch
    %14 = sbr.rel (0) target = $region5
  $region4: #{crf_decoder_forward.1} parent=0 // pred_region
    _
  $region5: #{crf_decoder_forward.1} parent=0 // pred_fallthru
    _
  // Predicated region
  $region6: #{crf_decoder_forward.1} parent=0 // pred_check
    _
  $region7: #{crf_decoder_forward.1} parent=0 // pred_check_branch
    %16 = sbr.rel (0) target = $region9
  $region8: #{crf_decoder_forward.1} parent=0 // pred_region
    _
  $region9: #{crf_decoder_forward.1} parent=0 // pred_fallthru
    _
  // Predicated region
  $region10: #{crf_decoder_forward.1} parent=0 // pred_check
    _
  $region11: #{crf_decoder_forward.1} parent=0 // pred_check_branch
    %18 = sbr.rel (0) target = $region13
  $region12: #{crf_decoder_forward.1} parent=0 // pred_region
    _
  $region13: #{crf_decoder_forward.1} parent=0 // pred_fallthru
    _
  // Predicated region
  $region14: #{crf_decoder_forward.1} parent=0 // pred_check
    _
  $region15: #{crf_decoder_forward.1} parent=0 // pred_check_branch
    %20 = sbr.rel (0) target = $region17
  $region16: #{crf_decoder_forward.1} parent=0 // pred_region
    _
  $region17: #{crf_decoder_forward.1} parent=0 // pred_fallthru
    _
  // Predicated region
  $region18: #{crf_decoder_forward.1} parent=0 // pred_check
    _
  $region19: #{crf_decoder_forward.1} parent=0 // pred_check_branch
    %22 = sbr.rel (0) target = $region21
  $region20: #{crf_decoder_forward.1} parent=0 // pred_region
    _
  $region21: #{crf_decoder_forward.1} parent=0 // pred_fallthru
    _
  // Predicated region
  $region22: #{crf_decoder_forward.1} parent=0 // pred_check
    _
  $region23: #{crf_decoder_forward.1} parent=0 // pred_check_branch
    %24 = sbr.rel (0) target = $region25
  $region24: #{crf_decoder_forward.1} parent=0 // pred_region
    _
  $region25: #{crf_decoder_forward.1} parent=0 // pred_fallthru
    _
  %v26 = vlaneseq
  %v27 = vshrl.u32 %v26, 7
  %p28 = scmp.eq.s32.totalorder 0, 0
  // Predicated region
  $region26: #{crf_decoder_forward.1} parent=0 // pred_check
    %p29 = pneg %p28
  $region27: #{crf_decoder_forward.1} parent=0 // pred_check_branch
    %31 = sbr.rel (%p29) target = $region29
  $region28: #{crf_decoder_forward.1} parent=0 // pred_region
    %vm32 = vcmp.eq.s32.totalorder %v27, 5
    %v33 = vsel %vm32, 0.0, -10000.0
    %34 = vst [vmem:[#allocation2] sm:$0xff] %v33
  $region29: #{crf_decoder_forward.1} parent=0 // pred_fallthru
    _
  %v35 = vld [vmem:[%s2] sm:$0xf]
  %v36 = vld [vmem:[%s3] sm:$0xff]
  %v37 = vld [vmem:[%s4] sm:$0xff]
  %39 = vset.pattern.permute.xlu0 0
  %40 = vperm.xlu0 %39, %v37
  %v41 = vpop.permute.xlu0 %40
  %43 = vset.pattern.permute.xlu0 1
  %44 = vperm.xlu0 %43, %v37
  %v45 = vpop.permute.xlu0 %44
  %47 = vset.pattern.permute.xlu0 2
  %48 = vperm.xlu0 %47, %v37
  %v49 = vpop.permute.xlu0 %48
  %51 = vset.pattern.permute.xlu0 3
  %52 = vperm.xlu0 %51, %v37
  %v53 = vpop.permute.xlu0 %52
  %55 = vset.pattern.permute.xlu0 4
  %56 = vperm.xlu0 %55, %v37
  %v57 = vpop.permute.xlu0 %56
  %59 = vset.pattern.permute.xlu0 5
  %60 = vperm.xlu0 %59, %v37
  %v61 = vpop.permute.xlu0 %60
  %63 = vset.pattern.permute.xlu0 6
  %64 = vperm.xlu0 %63, %v37
  %v65 = vpop.permute.xlu0 %64
  %67 = vset.pattern.permute.xlu0 7
  %68 = vperm.xlu0 %67, %v37
  %v69 = vpop.permute.xlu0 %68
  %v71 = vld [vmem:[%s5] sm:$0xff]
  %73 = vset.pattern.permute.xlu0 0
  %74 = vperm.xlu0 %73, %v71
  %v75 = vpop.permute.xlu0 %74
  %v77 = vld [vmem:[%s1] sm:$0x1]
  %s78 = smul.u32 0, 8
  loop: start=0, step=1, limit=8
  $region30: #{crf_decoder_forward.1} parent=0 // loop_pre_header
    _
  $region31: #{crf_decoder_forward.1} parent=0 // loop_header
    %s80 = sphi 0, %s84
    %p81 = scmp.ge.s32.totalorder %s80, 8
  $region32: #{crf_decoder_forward.1} parent=0 // loop_header_branch
    %83 = sbr.rel (%p81) target = $region36
  $region33: #{crf_decoder_forward.1} parent=0 // loop_body
    %s85 = sadd.s32 %s78, %s80
    %s86 = smul.u32 %s80, 4
    %s87 = smul.addr %s86, 4
    %s88 = scalar_lea.vmem %s0, %s87
    %v89 = vld [vmem:[%s88] sm:$0xf]
    %v90 = vld [vmem:[%s88 + $0x4] sm:$0xf]
    %v91 = vld [vmem:[%s88 + $0x8] sm:$0xf]
    %v92 = vld [vmem:[%s88 + $0xc] sm:$0xf]
    %94 = vset.pattern.permute.xlu0 0
    %95 = vperm.xlu0 %94, %v36
    %v96 = vpop.permute.xlu0 %95
    %v102 = vunpack.c.l.b16 %v89
    %v103 = vunpack.c.l.b16 %v90
    %v104 = vunpack.c.l.b16 %v91
    %v105 = vunpack.c.l.b16 %v92
    %v106 = vpack.c.b16 %v103, %v102
    %v107 = vpack.c.b16 %v105, %v104
    %vm110 = vcmask 261120
    %v112 = vsel %vm110, %v35, 0
    %114 = vmatprep.subr.bf16.mxu0 0
    %115 = vmatpush1.bf16.msra.mxu0 %v106
    %116 = vmatprep.subr.bf16.mxu0 0
    %117 = vmatpush1.bf16.msra.mxu0 %v107
    %118 = vmatprep.subr.bf16.mxu0 0
    %119 = vmatpush1.bf16.msra.mxu0 0
    %120 = vmatprep.subr.bf16.mxu0 0
    %121 = vmatpush1.bf16.msra.mxu0 0
    %122 = vmatprep.subr.bf16.mxu0 0
    %123 = vmatpush1.bf16.msra.mxu0 0
    %124 = vmatprep.subr.bf16.mxu0 0
    %125 = vmatpush1.bf16.msra.mxu0 0
    %126 = vmatprep.subr.bf16.mxu0 0
    %127 = vmatpush1.bf16.msra.mxu0 0
    %128 = vmatprep.subr.bf16.mxu0 0
    %129 = vmatpush1.bf16.msra.mxu0 0
    %130 = vmatprep.subr.bf16.mxu0 0
    %131 = vmatpush1.bf16.msra.mxu0 0
    %132 = vmatprep.subr.bf16.mxu0 0
    %133 = vmatpush1.bf16.msra.mxu0 0
    %134 = vmatprep.subr.bf16.mxu0 0
    %135 = vmatpush1.bf16.msra.mxu0 0
    %136 = vmatprep.subr.bf16.mxu0 0
    %137 = vmatpush1.bf16.msra.mxu0 0
    %138 = vmatprep.subr.bf16.mxu0 0
    %139 = vmatpush1.bf16.msra.mxu0 0
    %140 = vmatprep.subr.bf16.mxu0 0
    %141 = vmatpush1.bf16.msra.mxu0 0
    %142 = vmatprep.subr.bf16.mxu0 0
    %143 = vmatpush1.bf16.msra.mxu0 0
    %144 = vmatprep.subr.bf16.mxu0 0
    %145 = vmatpush1.bf16.msra.mxu0 0
    %146 = vmatprep.mubr.bf16.mxu0 0
    %147 = vmatmul.mubr.bf16.gmra.mrb[0].mxu0 %v112
    %v148 = vpop.f32.mrb[0].mxu0
    %v149 = vadd.f32 %v96, %v148
    %v150 = vpop.f32.mrb[0].mxu0
    %v151 = vpop.f32.mrb[0].mxu0
    %v152 = vpop.f32.mrb[0].mxu0
    %153 = vdwg.mxu0
    %v154 = vrot.slane %v149, 4
    %v155 = vmax.f32 %v149, %v154
    %v156 = vrot.slane %v155, 2
    %v157 = vmax.f32 %v155, %v156
    %v158 = vrot.slane %v157, 1
    %v159 = vmax.f32 %v157, %v158
    %v160 = vsub.f32 %v149, %v159
    %v161 = vmul.f32 %v160, 1.442695
    %v162 = vpow.pop %v161
    %v163 = vrot.slane %v162, 4
    %v164 = vadd.f32 %v162, %v163
    %v165 = vrot.slane %v164, 2
    %v166 = vadd.f32 %v164, %v165
    %v167 = vrot.slane %v166, 1
    %v168 = vadd.f32 %v166, %v167
    %v169 = vrcp.pop %v168
    %v170 = vmul.f32 %v162, %v169
    %s171 = smul.u32 %s80, 8
    %s172 = scalar_lea.vmem %s6, %s171
    %173 = vst [vmem:[%s172] sm:$0xff] %v170
    %v174 = vld [vmem:[#allocation2] sm:$0xff]
    %v175 = vlaneseq
    %v176 = vshrl.u32 %v175, 7
    %v177 = vsub.s32 0, %v176
    %v178 = vrot.slane %v174, %v177
    %v179 = vadd.f32 %v178, %v41
    %v180 = vlaneseq
    %v181 = vshrl.u32 %v180, 7
    %v182 = vsub.s32 1, %v181
    %v183 = vrot.slane %v174, %v182
    %v184 = vadd.f32 %v183, %v45
    %vm185 = vcmp.gt.f32.partialorder %v184, %v179
    %v186 = vsel %vm185, %v184, %v179
    %v187 = vsel %vm185, 1, 0
    %v188 = vlaneseq
    %v189 = vshrl.u32 %v188, 7
    %v190 = vsub.s32 2, %v189
    %v191 = vrot.slane %v174, %v190
    %v192 = vadd.f32 %v191, %v49
    %vm193 = vcmp.gt.f32.partialorder %v192, %v186
    %v194 = vsel %vm193, %v192, %v186
    %v195 = vsel %vm193, 2, %v187
    %v196 = vlaneseq
    %v197 = vshrl.u32 %v196, 7
    %v198 = vsub.s32 3, %v197
    %v199 = vrot.slane %v174, %v198
    %v200 = vadd.f32 %v199, %v53
    %vm201 = vcmp.gt.f32.partialorder %v200, %v194
    %v202 = vsel %vm201, %v200, %v194
    %v203 = vsel %vm201, 3, %v195
    %v204 = vlaneseq
    %v205 = vshrl.u32 %v204, 7
    %v206 = vsub.s32 4, %v205
    %v207 = vrot.slane %v174, %v206
    %v208 = vadd.f32 %v207, %v57
    %vm209 = vcmp.gt.f32.partialorder %v208, %v202
    %v210 = vsel %vm209, %v208, %v202
    %v211 = vsel %vm209, 4, %v203
    %v212 = vlaneseq
    %v213 = vshrl.u32 %v212, 7
    %v214 = vsub.s32 5, %v213
    %v215 = vrot.slane %v174, %v214
    %v216 = vadd.f32 %v215, %v61
    %vm217 = vcmp.gt.f32.partialorder %v216, %v210
    %v218 = vsel %vm217, %v216, %v210
    %v219 = vsel %vm217, 5, %v211
    %v220 = vlaneseq
    %v221 = vshrl.u32 %v220, 7
    %v222 = vsub.s32 6, %v221
    %v223 = vrot.slane %v174, %v222
    %v224 = vadd.f32 %v223, %v65
    %vm225 = vcmp.gt.f32.partialorder %v224, %v218
    %v226 = vsel %vm225, %v224, %v218
    %v227 = vsel %vm225, 6, %v219
    %v228 = vlaneseq
    %v229 = vshrl.u32 %v228, 7
    %v230 = vsub.s32 7, %v229
    %v231 = vrot.slane %v174, %v230
    %v232 = vadd.f32 %v231, %v69
    %vm233 = vcmp.gt.f32.partialorder %v232, %v226
    %v234 = vsel %vm233, %v232, %v226
    %v235 = vsel %vm233, 7, %v227
    %v236 = vstv %s85
    %v237 = vsub.s32 %v77, %v236
    %vm238 = vcmp.gt.s32.totalorder %v237, 0
    %v239 = vsel %vm238, 1, 0
    %v240 = vlaneseq
    %v241 = vshrl.u32 %v240, 7
    %v242 = vsub.s32 0, %v241
    %v243 = vrot.slane %v239, %v242
    %vm244 = vcmp.eq.s32.totalorder %v243, 1
    %v245 = vsel %vm244, %v235, %v27
    %s246 = smul.u32 %s85, 8
    %s247 = scalar_lea.vmem [#allocation3], %s246
    %248 = vst [vmem:[%s247] sm:$0xff] %v245
    %v249 = vadd.f32 %v234, %v149
    %v250 = vsel %vm244, %v249, %v174
    %vm251 = vcmp.eq.s32.totalorder %v237, 1
    %v252 = vsel %vm251, 1, 0
    %v253 = vlaneseq
    %v254 = vshrl.u32 %v253, 7
    %v255 = vsub.s32 0, %v254
    %v256 = vrot.slane %v252, %v255
    %vm257 = vcmp.eq.s32.totalorder %v256, 1
    %v258 = vsel %vm257, %v75, 0.0
    %v259 = vadd.f32 %v250, %v258
    %260 = vst [vmem:[#allocation2] sm:$0xff] %v259
  $region34: #{crf_decoder_forward.1} parent=0 // loop_footer
    %s84 = sadd.s32 1, %s80
  $region35: #{crf_decoder_forward.1} parent=0 // loop_footer_branch
    %79 = sbr.rel target = $region31
  $region36: #{crf_decoder_forward.1} parent=0 // loop_exit
    _
  // Predicated region
  $region37: #{crf_decoder_forward.1} parent=0 // pred_check
    %p261 = pneg %p28
  $region38: #{crf_decoder_forward.1} parent=0 // pred_check_branch
    %263 = sbr.rel (%p261) target = $region40
  $region39: #{crf_decoder_forward.1} parent=0 // pred_region
    %v264 = vld [vmem:[#allocation2] sm:$0xff]
    %v266 = vrot.slane %v264, 7
    %vm268 = vcmp.gt.f32.partialorder %v264, %v266
    %v269 = vsel %vm268, %v264, %v266
    %v270 = vsel %vm268, 1, 0
    %v272 = vrot.slane %v269, 7
    %vm274 = vcmp.gt.f32.partialorder %v264, %v272
    %v275 = vsel %vm274, %v264, %v272
    %v276 = vrot.slane %v270, 7
    %v277 = vsel %vm274, 2, %v276
    %v279 = vrot.slane %v275, 7
    %vm281 = vcmp.gt.f32.partialorder %v264, %v279
    %v282 = vsel %vm281, %v264, %v279
    %v283 = vrot.slane %v277, 7
    %v284 = vsel %vm281, 3, %v283
    %v286 = vrot.slane %v282, 7
    %vm288 = vcmp.gt.f32.partialorder %v264, %v286
    %v289 = vsel %vm288, %v264, %v286
    %v290 = vrot.slane %v284, 7
    %v291 = vsel %vm288, 4, %v290
    %v293 = vrot.slane %v289, 7
    %vm295 = vcmp.gt.f32.partialorder %v264, %v293
    %v296 = vsel %vm295, %v264, %v293
    %v297 = vrot.slane %v291, 7
    %v298 = vsel %vm295, 5, %v297
    %v300 = vrot.slane %v296, 7
    %vm302 = vcmp.gt.f32.partialorder %v264, %v300
    %v303 = vsel %vm302, %v264, %v300
    %v304 = vrot.slane %v298, 7
    %v305 = vsel %vm302, 6, %v304
    %v307 = vrot.slane %v303, 7
    %vm309 = vcmp.gt.f32.partialorder %v264, %v307
    %v310 = vrot.slane %v305, 7
    %v311 = vsel %vm309, 7, %v310
    loop: start=0, step=1, limit=8
    $region41: #{crf_decoder_forward.1} parent=39 // loop_pre_header
      _
    $region42: #{crf_decoder_forward.1} parent=39 // loop_header
      %s313 = sphi 0, %s317
      %p314 = scmp.ge.s32.totalorder %s313, 8
      %v318 = vphi %v311, %v338
    $region43: #{crf_decoder_forward.1} parent=39 // loop_header_branch
      %316 = sbr.rel (%p314) target = $region47
    $region44: #{crf_decoder_forward.1} parent=39 // loop_body
      %s319 = ssub.s32 7, %s313
      %s320 = scalar_lea.vmem %s7, %s319
      %321 = vst [vmem:[%s320 - $0x7] sm:$0x80] %v318
      %v322 = vlaneseq
      %v323 = vshrl.u32 %v322, 7
      %v324 = vsub.s32 7, %v323
      %v325 = vrot.slane %v318, %v324
      %vm326 = vcmp.eq.s32.totalorder %v27, %v325
      %s327 = smul.u32 %s319, 8
      %s328 = scalar_lea.vmem [#allocation3], %s327
      %v329 = vld [vmem:[%s328] sm:$0xff]
      %v330 = vcvt.s32.f32 %v329
      %v331 = vsel %vm326, %v330, 0.0
      %v332 = vrot.slane %v331, 4
      %v333 = vadd.f32 %v331, %v332
      %v334 = vrot.slane %v333, 2
      %v335 = vadd.f32 %v333, %v334
      %v336 = vrot.slane %v335, 1
      %v337 = vadd.f32 %v335, %v336
      %v338 = vcvt.f32.s32.to.zero.pseudo %v337
    $region45: #{crf_decoder_forward.1} parent=39 // loop_footer
      %s317 = sadd.s32 1, %s313
    $region46: #{crf_decoder_forward.1} parent=39 // loop_footer_branch
      %312 = sbr.rel target = $region42
    $region47: #{crf_decoder_forward.1} parent=39 // loop_exit
      _
  $region40: #{crf_decoder_forward.1} parent=0 // pred_fallthru
    _
  // Predicated region
  $region48: #{crf_decoder_forward.1} parent=0 // pred_check
    _
  $region49: #{crf_decoder_forward.1} parent=0 // pred_check_branch
    %340 = sbr.rel (0) target = $region51
  $region50: #{crf_decoder_forward.1} parent=0 // pred_region
    _
  $region51: #{crf_decoder_forward.1} parent=0 // pred_fallthru
    _
  // Predicated region
  $region52: #{crf_decoder_forward.1} parent=0 // pred_check
    _
  $region53: #{crf_decoder_forward.1} parent=0 // pred_check_branch
    %342 = sbr.rel (0) target = $region55
  $region54: #{crf_decoder_forward.1} parent=0 // pred_region
    _
  $region55: #{crf_decoder_forward.1} parent=0 // pred_fallthru
    _
  // Predicated region
  $region56: #{crf_decoder_forward.1} parent=0 // pred_check
    _
  $region57: #{crf_decoder_forward.1} parent=0 // pred_check_branch
    %344 = sbr.rel (0) target = $region59
  $region58: #{crf_decoder_forward.1} parent=0 // pred_region
    _
  $region59: #{crf_decoder_forward.1} parent=0 // pred_fallthru
    _
  // Predicated region
  $region60: #{crf_decoder_forward.1} parent=0 // pred_check
    _
  $region61: #{crf_decoder_forward.1} parent=0 // pred_check_branch
    %346 = sbr.rel (0) target = $region63
  $region62: #{crf_decoder_forward.1} parent=0 // pred_region
    _
  $region63: #{crf_decoder_forward.1} parent=0 // pred_fallthru
    _

</llo_original>
